<compile_context>
chip_gen: v6e
topology: v6e:2x2x1
jax: 0.10.0
libtpu: 0.0.40
codegen_flags: <defaults>
</compile_context>

<pallas_src>
import jax
import jax.numpy as jnp
from jax.experimental import pallas as pl
from jax.experimental.pallas import tpu as pltpu


def _shuffle_from_keys(keys, z_ref, out_ref, scratch_ref, *, unroll):
    """Shared body.  `keys` is an (n, td) int32 value of random bits."""
    n, td = out_ref.shape

    # Single iota, reused for key mixing and the output-row match.
    row_idx = jax.lax.broadcasted_iota(jnp.int32, (n, td), 0)

    # Fold the row index into the low bits of the key -> strict total order,
    # so the rank loop needs only a single `<` per (element, source-row).
    n_pow2 = 1 if n <= 1 else (1 << (n - 1).bit_length())
    mixed = (keys & jnp.int32(-n_pow2)) | row_idx          # (n, td) int32

    # Stash the mixed keys so the loop can re-load single rows cheaply.
    scratch_ref[...] = mixed

    # rank[k, i] = #{ j : mixed[j, i] < mixed[k, i] }  (a permutation of 0..n-1)
    def rank_body(j, rank):
        key_j = scratch_ref[pl.ds(j, 1), :]                # (1, td)
        return rank + (key_j < mixed).astype(jnp.int32)    # 2 VALU ops/elem

    rank = jax.lax.fori_loop(0, n, rank_body,
                             jnp.zeros((n, td), jnp.int32), unroll=unroll)

    # Reuse the same scratch to hold the ranks for per-row loads in the gather.
    scratch_ref[...] = rank

    # out[rank[k, i], i] = z[k, i]; select into the carry (no add needed).
    def gather_body(k, acc):
        rank_k = scratch_ref[pl.ds(k, 1), :]               # (1, td)
        z_k = z_ref[pl.ds(k, 1), :]                        # (1, td)
        return jnp.where(row_idx == rank_k, z_k, acc)

    out_ref[...] = jax.lax.fori_loop(0, n, gather_body,
                                     jnp.zeros((n, td), z_ref.dtype),
                                     unroll=unroll)


def _make_prng_kernel(unroll):
    def kernel(seed_ref, z_ref, out_ref, scratch_ref):
        n, td = out_ref.shape
        # Independent random stream per feature tile.
        pltpu.prng_seed(seed_ref[0] + pl.program_id(0))
        bits = pltpu.prng_random_bits((n, td))
        if bits.dtype != jnp.int32:
            bits = pltpu.bitcast(bits, jnp.int32)
        _shuffle_from_keys(bits, z_ref, out_ref, scratch_ref, unroll=unroll)
    return kernel


def _make_keys_kernel(unroll):
    def kernel(keys_ref, z_ref, out_ref, scratch_ref):
        _shuffle_from_keys(keys_ref[...], z_ref, out_ref, scratch_ref,
                           unroll=unroll)
    return kernel


def _pick_tile_d(d_pad, n, max_tile_d):
    # VMEM-aware cap: ~28 B/elem (double-buffered inputs/output + int32
    # scratch); stay well under the smallest default scoped-VMEM budget.
    budget = 12 * 1024 * 1024
    cap = max(128, min(max_tile_d, (budget // (28 * max(n, 1))) // 128 * 128))
    cap = min(cap, d_pad)
    cands = [t for t in range(128, cap + 1, 128) if d_pad % t == 0]
    if not cands:
        return 128
    # Prefer >= 2 grid steps so the "parallel" axis can use both v7x TCs.
    multi = [t for t in cands if d_pad // t >= 2]
    return max(multi) if multi else max(cands)


def shuffling_forward(z, rng_key, *, max_tile_d=2048, use_inkernel_prng=True):
    """Independently shuffle each column of z (shape (n, d)) along the batch."""
    n, d = z.shape

    # Pad the feature dim to a multiple of 128 (lane-dense, unmasked stores).
    d_pad = -(-d // 128) * 128
    z_p = z if d_pad == d else jnp.pad(z, ((0, 0), (0, d_pad - d)))

    tile_d = _pick_tile_d(d_pad, n, max_tile_d)
    grid = (d_pad // tile_d,)
    unroll = True if n <= 16 else 8

    compiler_params = pltpu.CompilerParams(dimension_semantics=("parallel",))
    scratch = [pltpu.VMEM((n, tile_d), jnp.int32)]
    out_shape = jax.ShapeDtypeStruct((n, d_pad), z.dtype)
    elt = jnp.dtype(z.dtype).itemsize

    out_p = None
    if use_inkernel_prng:
        try:
            seed = jax.lax.bitcast_convert_type(
                jax.random.bits(rng_key, (1,), dtype=jnp.uint32), jnp.int32)
            idx_map = lambda i, seed_ref: (0, i)
            out_p = pl.pallas_call(
                _make_prng_kernel(unroll),
                out_shape=out_shape,
                grid_spec=pltpu.PrefetchScalarGridSpec(
                    num_scalar_prefetch=1,
                    grid=grid,
                    in_specs=[pl.BlockSpec((n, tile_d), idx_map)],
                    out_specs=pl.BlockSpec((n, tile_d), idx_map),
                    scratch_shapes=scratch),
                compiler_params=compiler_params,
                cost_estimate=pl.CostEstimate(
                    flops=4 * n * n * d_pad, transcendentals=0,
                    bytes_accessed=2 * n * d_pad * elt),
            )(seed, z_p)
            out_p = jax.block_until_ready(out_p)
        except Exception:
            # Hardware-PRNG path failed to lower on this backend; fall back to
            # externally generated keys (same semantics, +33% HBM traffic).
            out_p = None

    if out_p is None:
        rand_keys = jax.lax.bitcast_convert_type(
            jax.random.bits(rng_key, (n, d_pad), dtype=jnp.uint32), jnp.int32)
        spec = pl.BlockSpec((n, tile_d), lambda i: (0, i))
        out_p = pl.pallas_call(
            _make_keys_kernel(unroll),
            out_shape=out_shape,
            grid_spec=pltpu.PrefetchScalarGridSpec(
                num_scalar_prefetch=0,
                grid=grid,
                in_specs=[spec, spec],          # keys, z
                out_specs=spec,
                scratch_shapes=scratch),
            compiler_params=compiler_params,
            cost_estimate=pl.CostEstimate(
                flops=4 * n * n * d_pad, transcendentals=0,
                bytes_accessed=2 * n * d_pad * elt + 4 * n * d_pad),
        )(rand_keys, z_p)

    return out_p if d_pad == d else out_p[:, :d]


if __name__ == "__main__":
    key = jax.random.PRNGKey(0)
    zk, sk = jax.random.split(key)

    n, d = 8, 256  # batch=8, hidden=256 (2 lane-dense tiles of 128)
    z = jax.random.normal(zk, (n, d), dtype=jnp.float32)

    out = shuffling_forward(z, sk)
    out = jax.block_until_ready(out)

    # Sanity check: every column of the output must be a permutation of the
    # corresponding column of the input (values are moved, never modified).
    assert out.shape == z.shape
    assert jnp.allclose(jnp.sort(z, axis=0), jnp.sort(out, axis=0)), \
        "columns are not permutations of the input columns"

    print("KERNEL_OK")
</pallas_src>

<mosaic_0001>
module attributes {stable_mosaic.version = 11 : i64} {
  func.func @kernel(%arg0: i32, %arg1: memref<1xi32, #tpu.memory_space<smem>>, %arg2: memref<8x128xf32, #tpu.memory_space<vmem>>, %arg3: memref<8x128xf32, #tpu.memory_space<vmem>>, %arg4: memref<8x128xi32, #tpu.memory_space<vmem>>) attributes {dimension_semantics = [#tpu.dimension_semantics<parallel>], iteration_bounds = array<i64: 2>, scalar_prefetch = 1 : i64, scratch_operands = 1 : i64, tpu.core_type = #tpu.core_type<tc>, window_params = [{transform_indices = @transform_0, window_bounds = array<i64: 8, 128>}, {transform_indices = @transform_1, window_bounds = array<i64: 8, 128>}]} {
    %c0 = arith.constant 0 : index
    %0 = memref.load %arg1[%c0] : memref<1xi32, #tpu.memory_space<smem>>
    %1 = arith.addi %0, %arg0 : i32
    "tpu.prng_set_seed_32"(%1) : (i32) -> ()
    %2 = "tpu.prng_random_bits"() : () -> vector<8x128xi32>
    %3 = tpu.iota {dimensions = array<i32: 0>} : vector<8x128xi32>
    %c-8_i32 = arith.constant -8 : i32
    %4 = vector.broadcast %c-8_i32 : i32 to vector<8x128xi32>
    %5 = arith.andi %2, %4 : vector<8x128xi32>
    %6 = arith.ori %5, %3 : vector<8x128xi32>
    %c0_0 = arith.constant 0 : index
    %c0_1 = arith.constant 0 : index
    %7 = vector.load %arg4[%c0_0, %c0_1] : memref<8x128xi32, #tpu.memory_space<vmem>>, vector<8x128xi32>
    tpu.vector_store %arg4[%c0_0, %c0_1], %6 {strides = array<i32>} : memref<8x128xi32, #tpu.memory_space<vmem>>, vector<8x128xi32>,
    %c0_i32 = arith.constant 0 : i32
    %8 = vector.broadcast %c0_i32 : i32 to vector<8x128xi32>
    %c0_i32_2 = arith.constant 0 : i32
    %9 = arith.index_cast %c0_i32_2 : i32 to index
    %c0_3 = arith.constant 0 : index
    %10 = vector.load %arg4[%9, %c0_3] : memref<8x128xi32, #tpu.memory_space<vmem>>, vector<1x128xi32>
    %11 = vector.broadcast %10 : vector<1x128xi32> to vector<8x128xi32>
    %12 = arith.cmpi slt, %11, %6 : vector<8x128xi32>
    %13 = arith.extui %12 : vector<8x128xi1> to vector<8x128xi32>
    %14 = arith.addi %8, %13 : vector<8x128xi32>
    %c1_i32 = arith.constant 1 : i32
    %15 = arith.index_cast %c1_i32 : i32 to index
    %c0_4 = arith.constant 0 : index
    %16 = vector.load %arg4[%15, %c0_4] : memref<8x128xi32, #tpu.memory_space<vmem>>, vector<1x128xi32>
    %17 = vector.broadcast %16 : vector<1x128xi32> to vector<8x128xi32>
    %18 = arith.cmpi slt, %17, %6 : vector<8x128xi32>
    %19 = arith.extui %18 : vector<8x128xi1> to vector<8x128xi32>
    %20 = arith.addi %14, %19 : vector<8x128xi32>
    %c2_i32 = arith.constant 2 : i32
    %21 = arith.index_cast %c2_i32 : i32 to index
    %c0_5 = arith.constant 0 : index
    %22 = vector.load %arg4[%21, %c0_5] : memref<8x128xi32, #tpu.memory_space<vmem>>, vector<1x128xi32>
    %23 = vector.broadcast %22 : vector<1x128xi32> to vector<8x128xi32>
    %24 = arith.cmpi slt, %23, %6 : vector<8x128xi32>
    %25 = arith.extui %24 : vector<8x128xi1> to vector<8x128xi32>
    %26 = arith.addi %20, %25 : vector<8x128xi32>
    %c3_i32 = arith.constant 3 : i32
    %27 = arith.index_cast %c3_i32 : i32 to index
    %c0_6 = arith.constant 0 : index
    %28 = vector.load %arg4[%27, %c0_6] : memref<8x128xi32, #tpu.memory_space<vmem>>, vector<1x128xi32>
    %29 = vector.broadcast %28 : vector<1x128xi32> to vector<8x128xi32>
    %30 = arith.cmpi slt, %29, %6 : vector<8x128xi32>
    %31 = arith.extui %30 : vector<8x128xi1> to vector<8x128xi32>
    %32 = arith.addi %26, %31 : vector<8x128xi32>
    %c4_i32 = arith.constant 4 : i32
    %33 = arith.index_cast %c4_i32 : i32 to index
    %c0_7 = arith.constant 0 : index
    %34 = vector.load %arg4[%33, %c0_7] : memref<8x128xi32, #tpu.memory_space<vmem>>, vector<1x128xi32>
    %35 = vector.broadcast %34 : vector<1x128xi32> to vector<8x128xi32>
    %36 = arith.cmpi slt, %35, %6 : vector<8x128xi32>
    %37 = arith.extui %36 : vector<8x128xi1> to vector<8x128xi32>
    %38 = arith.addi %32, %37 : vector<8x128xi32>
    %c5_i32 = arith.constant 5 : i32
    %39 = arith.index_cast %c5_i32 : i32 to index
    %c0_8 = arith.constant 0 : index
    %40 = vector.load %arg4[%39, %c0_8] : memref<8x128xi32, #tpu.memory_space<vmem>>, vector<1x128xi32>
    %41 = vector.broadcast %40 : vector<1x128xi32> to vector<8x128xi32>
    %42 = arith.cmpi slt, %41, %6 : vector<8x128xi32>
    %43 = arith.extui %42 : vector<8x128xi1> to vector<8x128xi32>
    %44 = arith.addi %38, %43 : vector<8x128xi32>
    %c6_i32 = arith.constant 6 : i32
    %45 = arith.index_cast %c6_i32 : i32 to index
    %c0_9 = arith.constant 0 : index
    %46 = vector.load %arg4[%45, %c0_9] : memref<8x128xi32, #tpu.memory_space<vmem>>, vector<1x128xi32>
    %47 = vector.broadcast %46 : vector<1x128xi32> to vector<8x128xi32>
    %48 = arith.cmpi slt, %47, %6 : vector<8x128xi32>
    %49 = arith.extui %48 : vector<8x128xi1> to vector<8x128xi32>
    %50 = arith.addi %44, %49 : vector<8x128xi32>
    %c7_i32 = arith.constant 7 : i32
    %51 = arith.index_cast %c7_i32 : i32 to index
    %c0_10 = arith.constant 0 : index
    %52 = vector.load %arg4[%51, %c0_10] : memref<8x128xi32, #tpu.memory_space<vmem>>, vector<1x128xi32>
    %53 = vector.broadcast %52 : vector<1x128xi32> to vector<8x128xi32>
    %54 = arith.cmpi slt, %53, %6 : vector<8x128xi32>
    %55 = arith.extui %54 : vector<8x128xi1> to vector<8x128xi32>
    %56 = arith.addi %50, %55 : vector<8x128xi32>
    %c8_i32 = arith.constant 8 : i32
    %c0_11 = arith.constant 0 : index
    %c0_12 = arith.constant 0 : index
    %57 = vector.load %arg4[%c0_11, %c0_12] : memref<8x128xi32, #tpu.memory_space<vmem>>, vector<8x128xi32>
    tpu.vector_store %arg4[%c0_11, %c0_12], %56 {strides = array<i32>} : memref<8x128xi32, #tpu.memory_space<vmem>>, vector<8x128xi32>,
    %cst = arith.constant 0.000000e+00 : f32
    %58 = vector.broadcast %cst : f32 to vector<8x128xf32>
    %c0_i32_13 = arith.constant 0 : i32
    %59 = arith.index_cast %c0_i32_13 : i32 to index
    %c0_14 = arith.constant 0 : index
    %60 = vector.load %arg4[%59, %c0_14] : memref<8x128xi32, #tpu.memory_space<vmem>>, vector<1x128xi32>
    %61 = arith.index_cast %c0_i32_13 : i32 to index
    %c0_15 = arith.constant 0 : index
    %62 = vector.load %arg2[%61, %c0_15] : memref<8x128xf32, #tpu.memory_space<vmem>>, vector<1x128xf32>
    %63 = vector.broadcast %60 : vector<1x128xi32> to vector<8x128xi32>
    %64 = arith.cmpi eq, %3, %63 : vector<8x128xi32>
    %65 = vector.shape_cast %62 : vector<1x128xf32> to vector<1x128xf32>
    %66 = vector.broadcast %65 : vector<1x128xf32> to vector<8x128xf32>
    %67 = arith.select %64, %66, %58 : vector<8x128xi1>, vector<8x128xf32>
    %c1_i32_16 = arith.constant 1 : i32
    %68 = arith.index_cast %c1_i32_16 : i32 to index
    %c0_17 = arith.constant 0 : index
    %69 = vector.load %arg4[%68, %c0_17] : memref<8x128xi32, #tpu.memory_space<vmem>>, vector<1x128xi32>
    %70 = arith.index_cast %c1_i32_16 : i32 to index
    %c0_18 = arith.constant 0 : index
    %71 = vector.load %arg2[%70, %c0_18] : memref<8x128xf32, #tpu.memory_space<vmem>>, vector<1x128xf32>
    %72 = vector.broadcast %69 : vector<1x128xi32> to vector<8x128xi32>
    %73 = arith.cmpi eq, %3, %72 : vector<8x128xi32>
    %74 = vector.shape_cast %71 : vector<1x128xf32> to vector<1x128xf32>
    %75 = vector.broadcast %74 : vector<1x128xf32> to vector<8x128xf32>
    %76 = arith.select %73, %75, %67 : vector<8x128xi1>, vector<8x128xf32>
    %c2_i32_19 = arith.constant 2 : i32
    %77 = arith.index_cast %c2_i32_19 : i32 to index
    %c0_20 = arith.constant 0 : index
    %78 = vector.load %arg4[%77, %c0_20] : memref<8x128xi32, #tpu.memory_space<vmem>>, vector<1x128xi32>
    %79 = arith.index_cast %c2_i32_19 : i32 to index
    %c0_21 = arith.constant 0 : index
    %80 = vector.load %arg2[%79, %c0_21] : memref<8x128xf32, #tpu.memory_space<vmem>>, vector<1x128xf32>
    %81 = vector.broadcast %78 : vector<1x128xi32> to vector<8x128xi32>
    %82 = arith.cmpi eq, %3, %81 : vector<8x128xi32>
    %83 = vector.shape_cast %80 : vector<1x128xf32> to vector<1x128xf32>
    %84 = vector.broadcast %83 : vector<1x128xf32> to vector<8x128xf32>
    %85 = arith.select %82, %84, %76 : vector<8x128xi1>, vector<8x128xf32>
    %c3_i32_22 = arith.constant 3 : i32
    %86 = arith.index_cast %c3_i32_22 : i32 to index
    %c0_23 = arith.constant 0 : index
    %87 = vector.load %arg4[%86, %c0_23] : memref<8x128xi32, #tpu.memory_space<vmem>>, vector<1x128xi32>
    %88 = arith.index_cast %c3_i32_22 : i32 to index
    %c0_24 = arith.constant 0 : index
    %89 = vector.load %arg2[%88, %c0_24] : memref<8x128xf32, #tpu.memory_space<vmem>>, vector<1x128xf32>
    %90 = vector.broadcast %87 : vector<1x128xi32> to vector<8x128xi32>
    %91 = arith.cmpi eq, %3, %90 : vector<8x128xi32>
    %92 = vector.shape_cast %89 : vector<1x128xf32> to vector<1x128xf32>
    %93 = vector.broadcast %92 : vector<1x128xf32> to vector<8x128xf32>
    %94 = arith.select %91, %93, %85 : vector<8x128xi1>, vector<8x128xf32>
    %c4_i32_25 = arith.constant 4 : i32
    %95 = arith.index_cast %c4_i32_25 : i32 to index
    %c0_26 = arith.constant 0 : index
    %96 = vector.load %arg4[%95, %c0_26] : memref<8x128xi32, #tpu.memory_space<vmem>>, vector<1x128xi32>
    %97 = arith.index_cast %c4_i32_25 : i32 to index
    %c0_27 = arith.constant 0 : index
    %98 = vector.load %arg2[%97, %c0_27] : memref<8x128xf32, #tpu.memory_space<vmem>>, vector<1x128xf32>
    %99 = vector.broadcast %96 : vector<1x128xi32> to vector<8x128xi32>
    %100 = arith.cmpi eq, %3, %99 : vector<8x128xi32>
    %101 = vector.shape_cast %98 : vector<1x128xf32> to vector<1x128xf32>
    %102 = vector.broadcast %101 : vector<1x128xf32> to vector<8x128xf32>
    %103 = arith.select %100, %102, %94 : vector<8x128xi1>, vector<8x128xf32>
    %c5_i32_28 = arith.constant 5 : i32
    %104 = arith.index_cast %c5_i32_28 : i32 to index
    %c0_29 = arith.constant 0 : index
    %105 = vector.load %arg4[%104, %c0_29] : memref<8x128xi32, #tpu.memory_space<vmem>>, vector<1x128xi32>
    %106 = arith.index_cast %c5_i32_28 : i32 to index
    %c0_30 = arith.constant 0 : index
    %107 = vector.load %arg2[%106, %c0_30] : memref<8x128xf32, #tpu.memory_space<vmem>>, vector<1x128xf32>
    %108 = vector.broadcast %105 : vector<1x128xi32> to vector<8x128xi32>
    %109 = arith.cmpi eq, %3, %108 : vector<8x128xi32>
    %110 = vector.shape_cast %107 : vector<1x128xf32> to vector<1x128xf32>
    %111 = vector.broadcast %110 : vector<1x128xf32> to vector<8x128xf32>
    %112 = arith.select %109, %111, %103 : vector<8x128xi1>, vector<8x128xf32>
    %c6_i32_31 = arith.constant 6 : i32
    %113 = arith.index_cast %c6_i32_31 : i32 to index
    %c0_32 = arith.constant 0 : index
    %114 = vector.load %arg4[%113, %c0_32] : memref<8x128xi32, #tpu.memory_space<vmem>>, vector<1x128xi32>
    %115 = arith.index_cast %c6_i32_31 : i32 to index
    %c0_33 = arith.constant 0 : index
    %116 = vector.load %arg2[%115, %c0_33] : memref<8x128xf32, #tpu.memory_space<vmem>>, vector<1x128xf32>
    %117 = vector.broadcast %114 : vector<1x128xi32> to vector<8x128xi32>
    %118 = arith.cmpi eq, %3, %117 : vector<8x128xi32>
    %119 = vector.shape_cast %116 : vector<1x128xf32> to vector<1x128xf32>
    %120 = vector.broadcast %119 : vector<1x128xf32> to vector<8x128xf32>
    %121 = arith.select %118, %120, %112 : vector<8x128xi1>, vector<8x128xf32>
    %c7_i32_34 = arith.constant 7 : i32
    %122 = arith.index_cast %c7_i32_34 : i32 to index
    %c0_35 = arith.constant 0 : index
    %123 = vector.load %arg4[%122, %c0_35] : memref<8x128xi32, #tpu.memory_space<vmem>>, vector<1x128xi32>
    %124 = arith.index_cast %c7_i32_34 : i32 to index
    %c0_36 = arith.constant 0 : index
    %125 = vector.load %arg2[%124, %c0_36] : memref<8x128xf32, #tpu.memory_space<vmem>>, vector<1x128xf32>
    %126 = vector.broadcast %123 : vector<1x128xi32> to vector<8x128xi32>
    %127 = arith.cmpi eq, %3, %126 : vector<8x128xi32>
    %128 = vector.shape_cast %125 : vector<1x128xf32> to vector<1x128xf32>
    %129 = vector.broadcast %128 : vector<1x128xf32> to vector<8x128xf32>
    %130 = arith.select %127, %129, %121 : vector<8x128xi1>, vector<8x128xf32>
    %c8_i32_37 = arith.constant 8 : i32
    %c0_38 = arith.constant 0 : index
    %c0_39 = arith.constant 0 : index
    %131 = vector.load %arg3[%c0_38, %c0_39] : memref<8x128xf32, #tpu.memory_space<vmem>>, vector<8x128xf32>
    tpu.vector_store %arg3[%c0_38, %c0_39], %130 {strides = array<i32>} : memref<8x128xf32, #tpu.memory_space<vmem>>, vector<8x128xf32>,
    return
  }
  func.func @transform_0(%arg0: i32, %arg1: memref<1xi32, #tpu.memory_space<smem>>) -> (i32, i32) {
    %c0_i32 = arith.constant 0 : i32
    %c0_i32_0 = arith.constant 0 : i32
    return %c0_i32, %arg0 : i32, i32
  }
  func.func @transform_1(%arg0: i32, %arg1: memref<1xi32, #tpu.memory_space<smem>>) -> (i32, i32) {
    %c0_i32 = arith.constant 0 : i32
    %c0_i32_0 = arith.constant 0 : i32
    return %c0_i32, %arg0 : i32, i32
  }
}

module attributes {stable_mosaic.version = 11 : i64} {
  func.func @kernel(%arg0: i32, %arg1: memref<8x128xi32, #tpu.memory_space<vmem>>, %arg2: memref<8x128xf32, #tpu.memory_space<vmem>>, %arg3: memref<8x128xf32, #tpu.memory_space<vmem>>, %arg4: memref<8x128xi32, #tpu.memory_space<vmem>>) attributes {dimension_semantics = [#tpu.dimension_semantics<parallel>], iteration_bounds = array<i64: 2>, scalar_prefetch = 0 : i64, scratch_operands = 1 : i64, tpu.core_type = #tpu.core_type<tc>, window_params = [{transform_indices = @transform_0, window_bounds = array<i64: 8, 128>}, {transform_indices = @transform_1, window_bounds = array<i64: 8, 128>}, {transform_indices = @transform_2, window_bounds = array<i64: 8, 128>}]} {
    %c0 = arith.constant 0 : index
    %c0_0 = arith.constant 0 : index
    %0 = vector.load %arg1[%c0, %c0_0] : memref<8x128xi32, #tpu.memory_space<vmem>>, vector<8x128xi32>
    %1 = tpu.iota {dimensions = array<i32: 0>} : vector<8x128xi32>
    %c-8_i32 = arith.constant -8 : i32
    %2 = vector.broadcast %c-8_i32 : i32 to vector<8x128xi32>
    %3 = arith.andi %0, %2 : vector<8x128xi32>
    %4 = arith.ori %3, %1 : vector<8x128xi32>
    %c0_1 = arith.constant 0 : index
    %c0_2 = arith.constant 0 : index
    %5 = vector.load %arg4[%c0_1, %c0_2] : memref<8x128xi32, #tpu.memory_space<vmem>>, vector<8x128xi32>
    tpu.vector_store %arg4[%c0_1, %c0_2], %4 {strides = array<i32>} : memref<8x128xi32, #tpu.memory_space<vmem>>, vector<8x128xi32>,
    %c0_i32 = arith.constant 0 : i32
    %6 = vector.broadcast %c0_i32 : i32 to vector<8x128xi32>
    %c0_i32_3 = arith.constant 0 : i32
    %7 = arith.index_cast %c0_i32_3 : i32 to index
    %c0_4 = arith.constant 0 : index
    %8 = vector.load %arg4[%7, %c0_4] : memref<8x128xi32, #tpu.memory_space<vmem>>, vector<1x128xi32>
    %9 = vector.broadcast %8 : vector<1x128xi32> to vector<8x128xi32>
    %10 = arith.cmpi slt, %9, %4 : vector<8x128xi32>
    %11 = arith.extui %10 : vector<8x128xi1> to vector<8x128xi32>
    %12 = arith.addi %6, %11 : vector<8x128xi32>
    %c1_i32 = arith.constant 1 : i32
    %13 = arith.index_cast %c1_i32 : i32 to index
    %c0_5 = arith.constant 0 : index
    %14 = vector.load %arg4[%13, %c0_5] : memref<8x128xi32, #tpu.memory_space<vmem>>, vector<1x128xi32>
    %15 = vector.broadcast %14 : vector<1x128xi32> to vector<8x128xi32>
    %16 = arith.cmpi slt, %15, %4 : vector<8x128xi32>
    %17 = arith.extui %16 : vector<8x128xi1> to vector<8x128xi32>
    %18 = arith.addi %12, %17 : vector<8x128xi32>
    %c2_i32 = arith.constant 2 : i32
    %19 = arith.index_cast %c2_i32 : i32 to index
    %c0_6 = arith.constant 0 : index
    %20 = vector.load %arg4[%19, %c0_6] : memref<8x128xi32, #tpu.memory_space<vmem>>, vector<1x128xi32>
    %21 = vector.broadcast %20 : vector<1x128xi32> to vector<8x128xi32>
    %22 = arith.cmpi slt, %21, %4 : vector<8x128xi32>
    %23 = arith.extui %22 : vector<8x128xi1> to vector<8x128xi32>
    %24 = arith.addi %18, %23 : vector<8x128xi32>
    %c3_i32 = arith.constant 3 : i32
    %25 = arith.index_cast %c3_i32 : i32 to index
    %c0_7 = arith.constant 0 : index
    %26 = vector.load %arg4[%25, %c0_7] : memref<8x128xi32, #tpu.memory_space<vmem>>, vector<1x128xi32>
    %27 = vector.broadcast %26 : vector<1x128xi32> to vector<8x128xi32>
    %28 = arith.cmpi slt, %27, %4 : vector<8x128xi32>
    %29 = arith.extui %28 : vector<8x128xi1> to vector<8x128xi32>
    %30 = arith.addi %24, %29 : vector<8x128xi32>
    %c4_i32 = arith.constant 4 : i32
    %31 = arith.index_cast %c4_i32 : i32 to index
    %c0_8 = arith.constant 0 : index
    %32 = vector.load %arg4[%31, %c0_8] : memref<8x128xi32, #tpu.memory_space<vmem>>, vector<1x128xi32>
    %33 = vector.broadcast %32 : vector<1x128xi32> to vector<8x128xi32>
    %34 = arith.cmpi slt, %33, %4 : vector<8x128xi32>
    %35 = arith.extui %34 : vector<8x128xi1> to vector<8x128xi32>
    %36 = arith.addi %30, %35 : vector<8x128xi32>
    %c5_i32 = arith.constant 5 : i32
    %37 = arith.index_cast %c5_i32 : i32 to index
    %c0_9 = arith.constant 0 : index
    %38 = vector.load %arg4[%37, %c0_9] : memref<8x128xi32, #tpu.memory_space<vmem>>, vector<1x128xi32>
    %39 = vector.broadcast %38 : vector<1x128xi32> to vector<8x128xi32>
    %40 = arith.cmpi slt, %39, %4 : vector<8x128xi32>
    %41 = arith.extui %40 : vector<8x128xi1> to vector<8x128xi32>
    %42 = arith.addi %36, %41 : vector<8x128xi32>
    %c6_i32 = arith.constant 6 : i32
    %43 = arith.index_cast %c6_i32 : i32 to index
    %c0_10 = arith.constant 0 : index
    %44 = vector.load %arg4[%43, %c0_10] : memref<8x128xi32, #tpu.memory_space<vmem>>, vector<1x128xi32>
    %45 = vector.broadcast %44 : vector<1x128xi32> to vector<8x128xi32>
    %46 = arith.cmpi slt, %45, %4 : vector<8x128xi32>
    %47 = arith.extui %46 : vector<8x128xi1> to vector<8x128xi32>
    %48 = arith.addi %42, %47 : vector<8x128xi32>
    %c7_i32 = arith.constant 7 : i32
    %49 = arith.index_cast %c7_i32 : i32 to index
    %c0_11 = arith.constant 0 : index
    %50 = vector.load %arg4[%49, %c0_11] : memref<8x128xi32, #tpu.memory_space<vmem>>, vector<1x128xi32>
    %51 = vector.broadcast %50 : vector<1x128xi32> to vector<8x128xi32>
    %52 = arith.cmpi slt, %51, %4 : vector<8x128xi32>
    %53 = arith.extui %52 : vector<8x128xi1> to vector<8x128xi32>
    %54 = arith.addi %48, %53 : vector<8x128xi32>
    %c8_i32 = arith.constant 8 : i32
    %c0_12 = arith.constant 0 : index
    %c0_13 = arith.constant 0 : index
    %55 = vector.load %arg4[%c0_12, %c0_13] : memref<8x128xi32, #tpu.memory_space<vmem>>, vector<8x128xi32>
    tpu.vector_store %arg4[%c0_12, %c0_13], %54 {strides = array<i32>} : memref<8x128xi32, #tpu.memory_space<vmem>>, vector<8x128xi32>,
    %cst = arith.constant 0.000000e+00 : f32
    %56 = vector.broadcast %cst : f32 to vector<8x128xf32>
    %c0_i32_14 = arith.constant 0 : i32
    %57 = arith.index_cast %c0_i32_14 : i32 to index
    %c0_15 = arith.constant 0 : index
    %58 = vector.load %arg4[%57, %c0_15] : memref<8x128xi32, #tpu.memory_space<vmem>>, vector<1x128xi32>
    %59 = arith.index_cast %c0_i32_14 : i32 to index
    %c0_16 = arith.constant 0 : index
    %60 = vector.load %arg2[%59, %c0_16] : memref<8x128xf32, #tpu.memory_space<vmem>>, vector<1x128xf32>
    %61 = vector.broadcast %58 : vector<1x128xi32> to vector<8x128xi32>
    %62 = arith.cmpi eq, %1, %61 : vector<8x128xi32>
    %63 = vector.shape_cast %60 : vector<1x128xf32> to vector<1x128xf32>
    %64 = vector.broadcast %63 : vector<1x128xf32> to vector<8x128xf32>
    %65 = arith.select %62, %64, %56 : vector<8x128xi1>, vector<8x128xf32>
    %c1_i32_17 = arith.constant 1 : i32
    %66 = arith.index_cast %c1_i32_17 : i32 to index
    %c0_18 = arith.constant 0 : index
    %67 = vector.load %arg4[%66, %c0_18] : memref<8x128xi32, #tpu.memory_space<vmem>>, vector<1x128xi32>
    %68 = arith.index_cast %c1_i32_17 : i32 to index
    %c0_19 = arith.constant 0 : index
    %69 = vector.load %arg2[%68, %c0_19] : memref<8x128xf32, #tpu.memory_space<vmem>>, vector<1x128xf32>
    %70 = vector.broadcast %67 : vector<1x128xi32> to vector<8x128xi32>
    %71 = arith.cmpi eq, %1, %70 : vector<8x128xi32>
    %72 = vector.shape_cast %69 : vector<1x128xf32> to vector<1x128xf32>
    %73 = vector.broadcast %72 : vector<1x128xf32> to vector<8x128xf32>
    %74 = arith.select %71, %73, %65 : vector<8x128xi1>, vector<8x128xf32>
    %c2_i32_20 = arith.constant 2 : i32
    %75 = arith.index_cast %c2_i32_20 : i32 to index
    %c0_21 = arith.constant 0 : index
    %76 = vector.load %arg4[%75, %c0_21] : memref<8x128xi32, #tpu.memory_space<vmem>>, vector<1x128xi32>
    %77 = arith.index_cast %c2_i32_20 : i32 to index
    %c0_22 = arith.constant 0 : index
    %78 = vector.load %arg2[%77, %c0_22] : memref<8x128xf32, #tpu.memory_space<vmem>>, vector<1x128xf32>
    %79 = vector.broadcast %76 : vector<1x128xi32> to vector<8x128xi32>
    %80 = arith.cmpi eq, %1, %79 : vector<8x128xi32>
    %81 = vector.shape_cast %78 : vector<1x128xf32> to vector<1x128xf32>
    %82 = vector.broadcast %81 : vector<1x128xf32> to vector<8x128xf32>
    %83 = arith.select %80, %82, %74 : vector<8x128xi1>, vector<8x128xf32>
    %c3_i32_23 = arith.constant 3 : i32
    %84 = arith.index_cast %c3_i32_23 : i32 to index
    %c0_24 = arith.constant 0 : index
    %85 = vector.load %arg4[%84, %c0_24] : memref<8x128xi32, #tpu.memory_space<vmem>>, vector<1x128xi32>
    %86 = arith.index_cast %c3_i32_23 : i32 to index
    %c0_25 = arith.constant 0 : index
    %87 = vector.load %arg2[%86, %c0_25] : memref<8x128xf32, #tpu.memory_space<vmem>>, vector<1x128xf32>
    %88 = vector.broadcast %85 : vector<1x128xi32> to vector<8x128xi32>
    %89 = arith.cmpi eq, %1, %88 : vector<8x128xi32>
    %90 = vector.shape_cast %87 : vector<1x128xf32> to vector<1x128xf32>
    %91 = vector.broadcast %90 : vector<1x128xf32> to vector<8x128xf32>
    %92 = arith.select %89, %91, %83 : vector<8x128xi1>, vector<8x128xf32>
    %c4_i32_26 = arith.constant 4 : i32
    %93 = arith.index_cast %c4_i32_26 : i32 to index
    %c0_27 = arith.constant 0 : index
    %94 = vector.load %arg4[%93, %c0_27] : memref<8x128xi32, #tpu.memory_space<vmem>>, vector<1x128xi32>
    %95 = arith.index_cast %c4_i32_26 : i32 to index
    %c0_28 = arith.constant 0 : index
    %96 = vector.load %arg2[%95, %c0_28] : memref<8x128xf32, #tpu.memory_space<vmem>>, vector<1x128xf32>
    %97 = vector.broadcast %94 : vector<1x128xi32> to vector<8x128xi32>
    %98 = arith.cmpi eq, %1, %97 : vector<8x128xi32>
    %99 = vector.shape_cast %96 : vector<1x128xf32> to vector<1x128xf32>
    %100 = vector.broadcast %99 : vector<1x128xf32> to vector<8x128xf32>
    %101 = arith.select %98, %100, %92 : vector<8x128xi1>, vector<8x128xf32>
    %c5_i32_29 = arith.constant 5 : i32
    %102 = arith.index_cast %c5_i32_29 : i32 to index
    %c0_30 = arith.constant 0 : index
    %103 = vector.load %arg4[%102, %c0_30] : memref<8x128xi32, #tpu.memory_space<vmem>>, vector<1x128xi32>
    %104 = arith.index_cast %c5_i32_29 : i32 to index
    %c0_31 = arith.constant 0 : index
    %105 = vector.load %arg2[%104, %c0_31] : memref<8x128xf32, #tpu.memory_space<vmem>>, vector<1x128xf32>
    %106 = vector.broadcast %103 : vector<1x128xi32> to vector<8x128xi32>
    %107 = arith.cmpi eq, %1, %106 : vector<8x128xi32>
    %108 = vector.shape_cast %105 : vector<1x128xf32> to vector<1x128xf32>
    %109 = vector.broadcast %108 : vector<1x128xf32> to vector<8x128xf32>
    %110 = arith.select %107, %109, %101 : vector<8x128xi1>, vector<8x128xf32>
    %c6_i32_32 = arith.constant 6 : i32
    %111 = arith.index_cast %c6_i32_32 : i32 to index
    %c0_33 = arith.constant 0 : index
    %112 = vector.load %arg4[%111, %c0_33] : memref<8x128xi32, #tpu.memory_space<vmem>>, vector<1x128xi32>
    %113 = arith.index_cast %c6_i32_32 : i32 to index
    %c0_34 = arith.constant 0 : index
    %114 = vector.load %arg2[%113, %c0_34] : memref<8x128xf32, #tpu.memory_space<vmem>>, vector<1x128xf32>
    %115 = vector.broadcast %112 : vector<1x128xi32> to vector<8x128xi32>
    %116 = arith.cmpi eq, %1, %115 : vector<8x128xi32>
    %117 = vector.shape_cast %114 : vector<1x128xf32> to vector<1x128xf32>
    %118 = vector.broadcast %117 : vector<1x128xf32> to vector<8x128xf32>
    %119 = arith.select %116, %118, %110 : vector<8x128xi1>, vector<8x128xf32>
    %c7_i32_35 = arith.constant 7 : i32
    %120 = arith.index_cast %c7_i32_35 : i32 to index
    %c0_36 = arith.constant 0 : index
    %121 = vector.load %arg4[%120, %c0_36] : memref<8x128xi32, #tpu.memory_space<vmem>>, vector<1x128xi32>
    %122 = arith.index_cast %c7_i32_35 : i32 to index
    %c0_37 = arith.constant 0 : index
    %123 = vector.load %arg2[%122, %c0_37] : memref<8x128xf32, #tpu.memory_space<vmem>>, vector<1x128xf32>
    %124 = vector.broadcast %121 : vector<1x128xi32> to vector<8x128xi32>
    %125 = arith.cmpi eq, %1, %124 : vector<8x128xi32>
    %126 = vector.shape_cast %123 : vector<1x128xf32> to vector<1x128xf32>
    %127 = vector.broadcast %126 : vector<1x128xf32> to vector<8x128xf32>
    %128 = arith.select %125, %127, %119 : vector<8x128xi1>, vector<8x128xf32>
    %c8_i32_38 = arith.constant 8 : i32
    %c0_39 = arith.constant 0 : index
    %c0_40 = arith.constant 0 : index
    %129 = vector.load %arg3[%c0_39, %c0_40] : memref<8x128xf32, #tpu.memory_space<vmem>>, vector<8x128xf32>
    tpu.vector_store %arg3[%c0_39, %c0_40], %128 {strides = array<i32>} : memref<8x128xf32, #tpu.memory_space<vmem>>, vector<8x128xf32>,
    return
  }
  func.func @transform_0(%arg0: i32) -> (i32, i32) {
    %c0_i32 = arith.constant 0 : i32
    %c0_i32_0 = arith.constant 0 : i32
    return %c0_i32, %arg0 : i32, i32
  }
  func.func @transform_1(%arg0: i32) -> (i32, i32) {
    %c0_i32 = arith.constant 0 : i32
    %c0_i32_0 = arith.constant 0 : i32
    return %c0_i32, %arg0 : i32, i32
  }
  func.func @transform_2(%arg0: i32) -> (i32, i32) {
    %c0_i32 = arith.constant 0 : i32
    %c0_i32_0 = arith.constant 0 : i32
    return %c0_i32, %arg0 : i32, i32
  }
}

</mosaic_0001>

<llo_original>
// kernel: tpu_custom_call.1
$region0: #{tpu_custom_call.1}
  #allocation0 [shape = 'u32[]', space=smem, size = 0x4, offset = 0x4, fixed_abs, tag = 'smem constant byte address 0x4 - core index']
  #allocation1 [shape = 'u32[144,128]{1,0:T(1,128)}', space=vmem, size = 0x12000, scoped, tag = 'internal scratch']
  #allocation2 [shape = 's32[8,128]{1,0:T(8,128)}', space=vmem, size = 0x1000, scoped, tag = 'scratch operand']
  #allocation3 [shape = 's32[1]{0}', space=sflag, size = 0x4, scoped, tag = 'scoped memory for tpu_custom_call.1']
  #allocation4 [shape = 's32[1]{0:T(128)S(6)}', space=smem, size = 0x200, scoped, tag = 'prefetched SMEM operand 0']
  %s0 = inlined_call_operand.<no memory space> [shape: s32[1], index: 0, kind: input, shape index: {}]
  %s1 = inlined_call_operand.hbm [shape: f32[8,256], index: 1, kind: input, shape index: {}]
  %s2 = inlined_call_operand.hbm [shape: f32[8,256], index: 2, kind: output, shape index: {}]
  %s3 = sld [smem:[#allocation0]]
  $region41: #{tpu_custom_call.1} parent=0
    _
  %s5 = ssub.s32 1, %s3
  %s6 = scalar_select 0, %s5, %s3
  %7 = sst [smem:[#allocation4]] %s0
  $region1: #{tpu_custom_call.1} parent=0
    #allocation5 [shape = 'u8[8192]{0}', space=vmem, size = 0x2000, scoped, tag = 'input window, operand 1']
    #allocation6 [shape = 's32[2]{0}', space=sflag, size = 0x8, scoped, tag = 'scoped memory for tpu_custom_call.1']
    #allocation7 [shape = 's32[2]{0}', space=sflag, size = 0x8, scoped, tag = 'scoped memory for tpu_custom_call.1']
    #allocation8 [shape = 'u8[8192]{0}', space=vmem, size = 0x2000, scoped, tag = 'output window, operand 0']
    %8 = vsyncpa [#allocation6], 0
    %s9 = scalar_lea.sflag [#allocation6], 1
    %10 = vsyncpa %s9, 0
    %11 = vsyncpa [#allocation7], 0
    %s12 = scalar_lea.sflag [#allocation7], 1
    %13 = vsyncpa %s12, 0
    loop: start=0, step=1, limit=4
    $region2: #{tpu_custom_call.1} parent=1 // loop_pre_header
      _
    $region3: #{tpu_custom_call.1} parent=1 // loop_header
      %s15 = sphi 0, %s19
      %p16 = scmp.ge.s32.totalorder %s15, 4
      %s25 = sphi 0, %s27
      %s28 = sphi 0, %s25
      %s29 = sphi 0, %s28
      %s45 = sphi 0, %s29
      %s51 = sphi 0, %s53
      %s54 = sphi 0, %s51
      %s55 = sphi 0, %s54
      %s71 = sphi 0, %s55
    $region4: #{tpu_custom_call.1} parent=1 // loop_header_branch
      %18 = sbr.rel (%p16) target = $region8
    $region5: #{tpu_custom_call.1} parent=1 // loop_body
      %s20 = ssub.s32 %s15, 1
      %s21 = ssub.s32 %s15, 2
      %s22 = sadd.s32 %s15, 1
      %s23 = ssub.s32 %s15, %s22
      %p24 = scmp.eq.s32.totalorder %s23, 0
      %s26 = sadd.s32 %s25, 1
      %s27 = scalar_select %p24, %s25, %s26
      %p30 = pneg %p24
      %p31 = scmp.eq.s32.totalorder %s15, 1
      %p32 = por %p30, %p31
      %p33 = scmp.ne.s32.totalorder %s25, %s28
      %p34 = scmp.eq.s32.totalorder %s15, 0
      %p35 = por %p33, %p34
      %p36 = scmp.ne.s32.totalorder %s25, %s28
      %p37 = scmp.eq.s32.totalorder %s20, 1
      %p38 = por %p36, %p37
      %p39 = scmp.ne.s32.totalorder %s28, %s29
      %p40 = scmp.eq.s32.totalorder %s20, 0
      %p41 = por %p39, %p40
      %p42 = scmp.ne.s32.totalorder %s28, %s29
      %p43 = scmp.eq.s32.totalorder %s21, 1
      %p44 = por %p42, %p43
      %p46 = scmp.ne.s32.totalorder %s29, %s45
      %p47 = scmp.eq.s32.totalorder %s21, 0
      %p48 = por %p46, %p47
      %s49 = ssub.s32 %s15, %s22
      %p50 = scmp.eq.s32.totalorder %s49, 0
      %s52 = sadd.s32 %s51, 1
      %s53 = scalar_select %p50, %s51, %s52
      %p56 = pneg %p50
      %p57 = scmp.eq.s32.totalorder %s15, 1
      %p58 = por %p56, %p57
      %p59 = scmp.ne.s32.totalorder %s51, %s54
      %p60 = scmp.eq.s32.totalorder %s15, 0
      %p61 = por %p59, %p60
      %p62 = scmp.ne.s32.totalorder %s51, %s54
      %p63 = scmp.eq.s32.totalorder %s20, 1
      %p64 = por %p62, %p63
      %p65 = scmp.ne.s32.totalorder %s54, %s55
      %p66 = scmp.eq.s32.totalorder %s20, 0
      %p67 = por %p65, %p66
      %p68 = scmp.ne.s32.totalorder %s54, %s55
      %p69 = scmp.eq.s32.totalorder %s21, 1
      %p70 = por %p68, %p69
      %p72 = scmp.ne.s32.totalorder %s55, %s71
      %p73 = scmp.eq.s32.totalorder %s21, 0
      %p74 = por %p72, %p73
      %p75 = scmp.le.s32.totalorder 1, %s15
      %p76 = scmp.lt.s32.totalorder %s15, 3
      %p77 = pnand %p75, %p76
      %p78 = pneg %p77
      // Predicated region
      $region9: #{tpu_custom_call.1} parent=5 // pred_check
        _
      $region10: #{tpu_custom_call.1} parent=5 // pred_check_branch
        %80 = sbr.rel (%p77) target = $region12
      $region11: #{tpu_custom_call.1} parent=5 // pred_region
        %s81 = ssub.s32 %s15, 1
      $region12: #{tpu_custom_call.1} parent=5 // pred_fallthru
        _
      %p82 = scmp.lt.s32.totalorder %s15, 2
      // Predicated region
      $region13: #{tpu_custom_call.1} parent=5 // pred_check
        %p83 = pneg %p82
      $region14: #{tpu_custom_call.1} parent=5 // pred_check_branch
        %85 = sbr.rel (%p83) target = $region16
      $region15: #{tpu_custom_call.1} parent=5 // pred_region
        // Predicated region
        $region17: #{tpu_custom_call.1} parent=15 // pred_check
          %p86 = pneg %p35
        $region18: #{tpu_custom_call.1} parent=15 // pred_check_branch
          %88 = sbr.rel (%p86) target = $region20
        $region19: #{tpu_custom_call.1} parent=15 // pred_region
          %s89 = sand.u32 %s25, 1
          %s90 = scalar_lea.sflag [#allocation6], %s89
          %s91 = sand.u32 %s25, 1
          %s92 = smul.addr %s91, 8
          %s93 = scalar_lea.vmem [#allocation5], %s92
          %s95 = ssub.s32 128, 128
          %96 = vsyncadd %s90, %s95
          %s97 = smul.addr %s15, 128
          %s98 = scalar_lea.hbm %s1, %s97
          %s100 = sshll.u32 %s93, 4
          %s101 = int_to_ptr.vmem [resolvable:$true] %s100
          %103 = dma.hbm_to_vmem [thread:$0]  %s98, 128, %s101, %s90
        $region20: #{tpu_custom_call.1} parent=15 // pred_fallthru
          _
      $region16: #{tpu_custom_call.1} parent=5 // pred_fallthru
        _
      %p104 = scmp.le.s32.totalorder 1, %s15
      %p105 = scmp.lt.s32.totalorder %s15, 3
      %p106 = pnand %p104, %p105
      %p107 = pneg %p106
      // Predicated region
      $region21: #{tpu_custom_call.1} parent=5 // pred_check
        _
      $region22: #{tpu_custom_call.1} parent=5 // pred_check_branch
        %109 = sbr.rel (%p106) target = $region24
      $region23: #{tpu_custom_call.1} parent=5 // pred_region
        %s110 = ssub.s32 %s15, 1
        %s111 = sand.u32 %s28, 1
        %s112 = scalar_lea.sflag [#allocation6], %s111
        %s113 = sand.u32 %s28, 1
        %s114 = smul.addr %s113, 8
        %s115 = scalar_lea.vmem [#allocation5], %s114
        // Predicated region
        $region25: #{tpu_custom_call.1} parent=23 // pred_check
          %p116 = pneg %p41
        $region26: #{tpu_custom_call.1} parent=23 // pred_check_branch
          %118 = sbr.rel (%p116) target = $region28
        $region27: #{tpu_custom_call.1} parent=23 // pred_region
          %119 = dma.done %s112, 128
        $region28: #{tpu_custom_call.1} parent=23 // pred_fallthru
          _
        %s120 = sand.u32 %s28, 1
        %s121 = scalar_lea.sflag [#allocation6], %s120
        %s122 = sand.u32 %s28, 1
        %s123 = smul.addr %s122, 8
        %s124 = scalar_lea.vmem [#allocation5], %s123
        %p125 = pneg %p41
        %p126 = pneg %p38
        %p127 = pneg %p67
        %p128 = pneg %p64
        %s129 = sand.u32 %s54, 1
        %s130 = scalar_lea.sflag [#allocation7], %s129
        %s131 = sand.u32 %s54, 1
        %s132 = smul.addr %s131, 8
        %s133 = scalar_lea.vmem [#allocation8], %s132
        %s134 = sld [smem:[#allocation4]]
        %s135 = sadd.s32 %s134, %s20
        %v136 = vlaneseq
        %v137 = vstv %s135
        %v138 = vxor.u32 %v137, %v137
        %v139 = vxor.u32 %v138, 466688986
        %v140 = vadd.s32 %v136, %v137
        %v141 = vadd.s32 %v140, %v140
        %v142 = vshll.u32 %v140, 13
        %v143 = vshrl.u32 %v140, 19
        %v144 = vor.u32 %v142, %v143
        %v145 = vxor.u32 %v141, %v144
        %v146 = vadd.s32 %v141, %v145
        %v147 = vshll.u32 %v145, 15
        %v148 = vshrl.u32 %v145, 17
        %v149 = vor.u32 %v147, %v148
        %v150 = vxor.u32 %v146, %v149
        %v151 = vadd.s32 %v146, %v150
        %v152 = vshll.u32 %v150, 26
        %v153 = vshrl.u32 %v150, 6
        %v154 = vor.u32 %v152, %v153
        %v155 = vxor.u32 %v151, %v154
        %v156 = vadd.s32 %v151, %v155
        %v157 = vshll.u32 %v155, 6
        %v158 = vshrl.u32 %v155, 26
        %v159 = vor.u32 %v157, %v158
        %v160 = vxor.u32 %v156, %v159
        %v161 = vadd.s32 %v156, %v137
        %v162 = vadd.s32 %v160, %v139
        %v163 = vadd.s32 %v162, 1
        %v164 = vadd.s32 %v161, %v163
        %v165 = vshll.u32 %v163, 17
        %v166 = vshrl.u32 %v163, 15
        %v167 = vor.u32 %v165, %v166
        %v168 = vxor.u32 %v164, %v167
        %v169 = vadd.s32 %v164, %v168
        %v170 = vshll.u32 %v168, 29
        %v171 = vshrl.u32 %v168, 3
        %v172 = vor.u32 %v170, %v171
        %v173 = vxor.u32 %v169, %v172
        %v174 = vadd.s32 %v169, %v173
        %v175 = vshll.u32 %v173, 16
        %v176 = vshrl.u32 %v173, 16
        %v177 = vor.u32 %v175, %v176
        %v178 = vxor.u32 %v174, %v177
        %v179 = vadd.s32 %v174, %v178
        %v180 = vshll.u32 %v178, 24
        %v181 = vshrl.u32 %v178, 8
        %v182 = vor.u32 %v180, %v181
        %v183 = vxor.u32 %v179, %v182
        %v184 = vadd.s32 %v179, %v139
        %v185 = vadd.s32 %v183, %v137
        %v186 = vadd.s32 %v185, 2
        %v187 = vadd.s32 %v184, %v186
        %v188 = vshll.u32 %v186, 13
        %v189 = vshrl.u32 %v186, 19
        %v190 = vor.u32 %v188, %v189
        %v191 = vxor.u32 %v187, %v190
        %v192 = vadd.s32 %v187, %v191
        %v193 = vshll.u32 %v191, 15
        %v194 = vshrl.u32 %v191, 17
        %v195 = vor.u32 %v193, %v194
        %v196 = vxor.u32 %v192, %v195
        %v197 = vadd.s32 %v192, %v196
        %v198 = vshll.u32 %v196, 26
        %v199 = vshrl.u32 %v196, 6
        %v200 = vor.u32 %v198, %v199
        %v201 = vxor.u32 %v197, %v200
        %v202 = vadd.s32 %v197, %v201
        %v203 = vshll.u32 %v201, 6
        %v204 = vshrl.u32 %v201, 26
        %v205 = vor.u32 %v203, %v204
        %v206 = vxor.u32 %v202, %v205
        %v207 = vadd.s32 %v202, %v137
        %v208 = vadd.s32 %v206, %v137
        %v209 = vadd.s32 %v208, 3
        %v210 = vadd.s32 %v207, %v209
        %v211 = vshll.u32 %v209, 17
        %v212 = vshrl.u32 %v209, 15
        %v213 = vor.u32 %v211, %v212
        %v214 = vxor.u32 %v210, %v213
        %v215 = vadd.s32 %v210, %v214
        %v216 = vshll.u32 %v214, 29
        %v217 = vshrl.u32 %v214, 3
        %v218 = vor.u32 %v216, %v217
        %v219 = vxor.u32 %v215, %v218
        %v220 = vadd.s32 %v215, %v219
        %v221 = vshll.u32 %v219, 16
        %v222 = vshrl.u32 %v219, 16
        %v223 = vor.u32 %v221, %v222
        %v224 = vxor.u32 %v220, %v223
        %v225 = vadd.s32 %v220, %v224
        %v226 = vshll.u32 %v224, 24
        %v227 = vshrl.u32 %v224, 8
        %v228 = vor.u32 %v226, %v227
        %v229 = vxor.u32 %v225, %v228
        %v230 = vadd.s32 %v225, %v137
        %v231 = vadd.s32 %v229, %v139
        %v232 = vadd.s32 %v231, 4
        %v233 = vadd.s32 %v230, %v232
        %v234 = vshll.u32 %v232, 13
        %v235 = vshrl.u32 %v232, 19
        %v236 = vor.u32 %v234, %v235
        %v237 = vxor.u32 %v233, %v236
        %v238 = vadd.s32 %v233, %v237
        %v239 = vshll.u32 %v237, 15
        %v240 = vshrl.u32 %v237, 17
        %v241 = vor.u32 %v239, %v240
        %v242 = vxor.u32 %v238, %v241
        %v243 = vadd.s32 %v238, %v242
        %v244 = vshll.u32 %v242, 26
        %v245 = vshrl.u32 %v242, 6
        %v246 = vor.u32 %v244, %v245
        %v247 = vxor.u32 %v243, %v246
        %v248 = vadd.s32 %v243, %v247
        %v249 = vshll.u32 %v247, 6
        %v250 = vshrl.u32 %v247, 26
        %v251 = vor.u32 %v249, %v250
        %v252 = vxor.u32 %v248, %v251
        %v253 = vadd.s32 %v248, %v139
        %v254 = vadd.s32 %v252, %v137
        %v255 = vadd.s32 %v254, 5
        %v256 = vxor.u32 %v253, %v255
        %257 = set.rngseed %v256
        %v258 = vrng
        %v259 = vlaneseq
        %v260 = vshrl.u32 %v259, 7
        %v261 = vand.u32 %v258, 4294967288
        %v262 = vor.u32 %v261, %v260
        %263 = vst [vmem:[#allocation2] sm:$0xff] %v262
        %v264 = vld [vmem:[#allocation2] sm:$0x1]
        %v265 = vlaneseq
        %v266 = vshrl.u32 %v265, 7
        %v267 = vsub.s32 0, %v266
        %v268 = vrot.slane %v264, %v267
        %vm269 = vcmp.lt.s32.totalorder %v268, %v262
        %v270 = vsel %vm269, 1, 0
        %v271 = vld [vmem:[#allocation2 + $0x1] sm:$0x1]
        %v272 = vlaneseq
        %v273 = vshrl.u32 %v272, 7
        %v274 = vsub.s32 0, %v273
        %v275 = vrot.slane %v271, %v274
        %vm276 = vcmp.lt.s32.totalorder %v275, %v262
        %v277 = vsel %vm276, 1, 0
        %v278 = vadd.s32 %v270, %v277
        %v279 = vld [vmem:[#allocation2 + $0x2] sm:$0x1]
        %v280 = vlaneseq
        %v281 = vshrl.u32 %v280, 7
        %v282 = vsub.s32 0, %v281
        %v283 = vrot.slane %v279, %v282
        %vm284 = vcmp.lt.s32.totalorder %v283, %v262
        %v285 = vsel %vm284, 1, 0
        %v286 = vadd.s32 %v278, %v285
        %v287 = vld [vmem:[#allocation2 + $0x3] sm:$0x1]
        %v288 = vlaneseq
        %v289 = vshrl.u32 %v288, 7
        %v290 = vsub.s32 0, %v289
        %v291 = vrot.slane %v287, %v290
        %vm292 = vcmp.lt.s32.totalorder %v291, %v262
        %v293 = vsel %vm292, 1, 0
        %v294 = vadd.s32 %v286, %v293
        %v295 = vld [vmem:[#allocation2 + $0x4] sm:$0x1]
        %v296 = vlaneseq
        %v297 = vshrl.u32 %v296, 7
        %v298 = vsub.s32 0, %v297
        %v299 = vrot.slane %v295, %v298
        %vm300 = vcmp.lt.s32.totalorder %v299, %v262
        %v301 = vsel %vm300, 1, 0
        %v302 = vadd.s32 %v294, %v301
        %v303 = vld [vmem:[#allocation2 + $0x5] sm:$0x1]
        %v304 = vlaneseq
        %v305 = vshrl.u32 %v304, 7
        %v306 = vsub.s32 0, %v305
        %v307 = vrot.slane %v303, %v306
        %vm308 = vcmp.lt.s32.totalorder %v307, %v262
        %v309 = vsel %vm308, 1, 0
        %v310 = vadd.s32 %v302, %v309
        %v311 = vld [vmem:[#allocation2 + $0x6] sm:$0x1]
        %v312 = vlaneseq
        %v313 = vshrl.u32 %v312, 7
        %v314 = vsub.s32 0, %v313
        %v315 = vrot.slane %v311, %v314
        %vm316 = vcmp.lt.s32.totalorder %v315, %v262
        %v317 = vsel %vm316, 1, 0
        %v318 = vadd.s32 %v310, %v317
        %v319 = vld [vmem:[#allocation2 + $0x7] sm:$0x1]
        %v320 = vlaneseq
        %v321 = vshrl.u32 %v320, 7
        %v322 = vsub.s32 0, %v321
        %v323 = vrot.slane %v319, %v322
        %vm324 = vcmp.lt.s32.totalorder %v323, %v262
        %v325 = vsel %vm324, 1, 0
        %v326 = vadd.s32 %v318, %v325
        %327 = vst [vmem:[#allocation2] sm:$0xff] %v326
        %v328 = vld [vmem:[#allocation2] sm:$0x1]
        %v329 = vld [vmem:[%s115] sm:$0x1]
        %v330 = vlaneseq
        %v331 = vshrl.u32 %v330, 7
        %v332 = vsub.s32 0, %v331
        %v333 = vrot.slane %v328, %v332
        %vm334 = vcmp.eq.s32.totalorder %v260, %v333
        %v335 = vlaneseq
        %v336 = vshrl.u32 %v335, 7
        %v337 = vsub.s32 0, %v336
        %v338 = vrot.slane %v329, %v337
        %v339 = vsel %vm334, %v338, 0.0
        %v340 = vld [vmem:[#allocation2 + $0x1] sm:$0x1]
        %v341 = vld [vmem:[%s115 + $0x1] sm:$0x1]
        %v342 = vlaneseq
        %v343 = vshrl.u32 %v342, 7
        %v344 = vsub.s32 0, %v343
        %v345 = vrot.slane %v340, %v344
        %vm346 = vcmp.eq.s32.totalorder %v260, %v345
        %v347 = vlaneseq
        %v348 = vshrl.u32 %v347, 7
        %v349 = vsub.s32 0, %v348
        %v350 = vrot.slane %v341, %v349
        %v351 = vsel %vm346, %v350, %v339
        %v352 = vld [vmem:[#allocation2 + $0x2] sm:$0x1]
        %v353 = vld [vmem:[%s115 + $0x2] sm:$0x1]
        %v354 = vlaneseq
        %v355 = vshrl.u32 %v354, 7
        %v356 = vsub.s32 0, %v355
        %v357 = vrot.slane %v352, %v356
        %vm358 = vcmp.eq.s32.totalorder %v260, %v357
        %v359 = vlaneseq
        %v360 = vshrl.u32 %v359, 7
        %v361 = vsub.s32 0, %v360
        %v362 = vrot.slane %v353, %v361
        %v363 = vsel %vm358, %v362, %v351
        %v364 = vld [vmem:[#allocation2 + $0x3] sm:$0x1]
        %v365 = vld [vmem:[%s115 + $0x3] sm:$0x1]
        %v366 = vlaneseq
        %v367 = vshrl.u32 %v366, 7
        %v368 = vsub.s32 0, %v367
        %v369 = vrot.slane %v364, %v368
        %vm370 = vcmp.eq.s32.totalorder %v260, %v369
        %v371 = vlaneseq
        %v372 = vshrl.u32 %v371, 7
        %v373 = vsub.s32 0, %v372
        %v374 = vrot.slane %v365, %v373
        %v375 = vsel %vm370, %v374, %v363
        %v376 = vld [vmem:[#allocation2 + $0x4] sm:$0x1]
        %v377 = vld [vmem:[%s115 + $0x4] sm:$0x1]
        %v378 = vlaneseq
        %v379 = vshrl.u32 %v378, 7
        %v380 = vsub.s32 0, %v379
        %v381 = vrot.slane %v376, %v380
        %vm382 = vcmp.eq.s32.totalorder %v260, %v381
        %v383 = vlaneseq
        %v384 = vshrl.u32 %v383, 7
        %v385 = vsub.s32 0, %v384
        %v386 = vrot.slane %v377, %v385
        %v387 = vsel %vm382, %v386, %v375
        %v388 = vld [vmem:[#allocation2 + $0x5] sm:$0x1]
        %v389 = vld [vmem:[%s115 + $0x5] sm:$0x1]
        %v390 = vlaneseq
        %v391 = vshrl.u32 %v390, 7
        %v392 = vsub.s32 0, %v391
        %v393 = vrot.slane %v388, %v392
        %vm394 = vcmp.eq.s32.totalorder %v260, %v393
        %v395 = vlaneseq
        %v396 = vshrl.u32 %v395, 7
        %v397 = vsub.s32 0, %v396
        %v398 = vrot.slane %v389, %v397
        %v399 = vsel %vm394, %v398, %v387
        %v400 = vld [vmem:[#allocation2 + $0x6] sm:$0x1]
        %v401 = vld [vmem:[%s115 + $0x6] sm:$0x1]
        %v402 = vlaneseq
        %v403 = vshrl.u32 %v402, 7
        %v404 = vsub.s32 0, %v403
        %v405 = vrot.slane %v400, %v404
        %vm406 = vcmp.eq.s32.totalorder %v260, %v405
        %v407 = vlaneseq
        %v408 = vshrl.u32 %v407, 7
        %v409 = vsub.s32 0, %v408
        %v410 = vrot.slane %v401, %v409
        %v411 = vsel %vm406, %v410, %v399
        %v412 = vld [vmem:[#allocation2 + $0x7] sm:$0x1]
        %v413 = vld [vmem:[%s115 + $0x7] sm:$0x1]
        %v414 = vlaneseq
        %v415 = vshrl.u32 %v414, 7
        %v416 = vsub.s32 0, %v415
        %v417 = vrot.slane %v412, %v416
        %vm418 = vcmp.eq.s32.totalorder %v260, %v417
        %v419 = vlaneseq
        %v420 = vshrl.u32 %v419, 7
        %v421 = vsub.s32 0, %v420
        %v422 = vrot.slane %v413, %v421
        %v423 = vsel %vm418, %v422, %v411
        %424 = vst [vmem:[%s133] sm:$0xff] %v423
        %s425 = sand.u32 %s54, 1
        %s426 = scalar_lea.sflag [#allocation7], %s425
        %s427 = sand.u32 %s54, 1
        %s428 = smul.addr %s427, 8
        %s429 = scalar_lea.vmem [#allocation8], %s428
        // Predicated region
        $region29: #{tpu_custom_call.1} parent=23 // pred_check
          %p430 = pneg %p64
        $region30: #{tpu_custom_call.1} parent=23 // pred_check_branch
          %432 = sbr.rel (%p430) target = $region32
        $region31: #{tpu_custom_call.1} parent=23 // pred_region
          %s434 = ssub.s32 128, 128
          %435 = vsyncadd %s426, %s434
          %s436 = smul.addr %s20, 128
          %s437 = scalar_lea.hbm %s2, %s436
          %s439 = sshll.u32 %s429, 4
          %s440 = int_to_ptr.vmem [resolvable:$true] %s439
          %442 = dma.vmem_to_hbm [thread:$0]  %s440, 128, %s437, %s426
        $region32: #{tpu_custom_call.1} parent=23 // pred_fallthru
          _
      $region24: #{tpu_custom_call.1} parent=5 // pred_fallthru
        _
      %p443 = scmp.le.s32.totalorder 2, %s15
      // Predicated region
      $region33: #{tpu_custom_call.1} parent=5 // pred_check
        %p444 = pneg %p443
      $region34: #{tpu_custom_call.1} parent=5 // pred_check_branch
        %446 = sbr.rel (%p444) target = $region36
      $region35: #{tpu_custom_call.1} parent=5 // pred_region
        %s447 = ssub.s32 %s15, 2
        // Predicated region
        $region37: #{tpu_custom_call.1} parent=35 // pred_check
          %p448 = pneg %p70
        $region38: #{tpu_custom_call.1} parent=35 // pred_check_branch
          %450 = sbr.rel (%p448) target = $region40
        $region39: #{tpu_custom_call.1} parent=35 // pred_region
          %s451 = sand.u32 %s55, 1
          %s452 = scalar_lea.sflag [#allocation7], %s451
          %s453 = sand.u32 %s55, 1
          %s454 = smul.addr %s453, 8
          %s455 = scalar_lea.vmem [#allocation8], %s454
          %456 = dma.done %s452, 128
        $region40: #{tpu_custom_call.1} parent=35 // pred_fallthru
          _
      $region36: #{tpu_custom_call.1} parent=5 // pred_fallthru
        _
    $region6: #{tpu_custom_call.1} parent=1 // loop_footer
      %s19 = sadd.s32 1, %s15
    $region7: #{tpu_custom_call.1} parent=1 // loop_footer_branch
      %14 = sbr.rel target = $region3
    $region8: #{tpu_custom_call.1} parent=1 // loop_exit
      _
    %457 = vsyncpa [#allocation6], 1
    %s458 = scalar_lea.sflag [#allocation6], 1
    %459 = vsyncpa %s458, 1
    %460 = vsyncpa [#allocation7], 1
    %s461 = scalar_lea.sflag [#allocation7], 1
    %462 = vsyncpa %s461, 1

// kernel: tpu_custom_call.1
$region0: #{tpu_custom_call.1}
  #allocation0 [shape = 'u32[]', space=smem, size = 0x4, offset = 0x4, fixed_abs, tag = 'smem constant byte address 0x4 - core index']
  #allocation1 [shape = 'u32[144,128]{1,0:T(1,128)}', space=vmem, size = 0x12000, scoped, tag = 'internal scratch']
  #allocation2 [shape = 's32[8,128]{1,0:T(8,128)}', space=vmem, size = 0x1000, scoped, tag = 'scratch operand']
  %s0 = inlined_call_operand.hbm [shape: s32[8,256], index: 0, kind: input, shape index: {}]
  %s1 = inlined_call_operand.hbm [shape: f32[8,256], index: 1, kind: input, shape index: {}]
  %s2 = inlined_call_operand.hbm [shape: f32[8,256], index: 2, kind: output, shape index: {}]
  %s3 = sld [smem:[#allocation0]]
  $region49: #{tpu_custom_call.1} parent=0
    _
  %s5 = ssub.s32 1, %s3
  %s6 = scalar_select 0, %s5, %s3
  $region1: #{tpu_custom_call.1} parent=0
    #allocation3 [shape = 'u8[8192]{0}', space=vmem, size = 0x2000, scoped, tag = 'input window, operand 0']
    #allocation4 [shape = 's32[2]{0}', space=sflag, size = 0x8, scoped, tag = 'scoped memory for tpu_custom_call.1']
    #allocation5 [shape = 's32[2]{0}', space=sflag, size = 0x8, scoped, tag = 'scoped memory for tpu_custom_call.1']
    #allocation6 [shape = 'u8[8192]{0}', space=vmem, size = 0x2000, scoped, tag = 'input window, operand 1']
    #allocation7 [shape = 's32[2]{0}', space=sflag, size = 0x8, scoped, tag = 'scoped memory for tpu_custom_call.1']
    #allocation8 [shape = 'u8[8192]{0}', space=vmem, size = 0x2000, scoped, tag = 'output window, operand 0']
    %7 = vsyncpa [#allocation4], 0
    %s8 = scalar_lea.sflag [#allocation4], 1
    %9 = vsyncpa %s8, 0
    %10 = vsyncpa [#allocation7], 0
    %s11 = scalar_lea.sflag [#allocation7], 1
    %12 = vsyncpa %s11, 0
    %13 = vsyncpa [#allocation5], 0
    %s14 = scalar_lea.sflag [#allocation5], 1
    %15 = vsyncpa %s14, 0
    loop: start=0, step=1, limit=4
    $region2: #{tpu_custom_call.1} parent=1 // loop_pre_header
      _
    $region3: #{tpu_custom_call.1} parent=1 // loop_header
      %s17 = sphi 0, %s21
      %p18 = scmp.ge.s32.totalorder %s17, 4
      %s27 = sphi 0, %s29
      %s30 = sphi 0, %s27
      %s31 = sphi 0, %s30
      %s47 = sphi 0, %s31
      %s53 = sphi 0, %s55
      %s56 = sphi 0, %s53
      %s57 = sphi 0, %s56
      %s73 = sphi 0, %s57
      %s79 = sphi 0, %s81
      %s82 = sphi 0, %s79
      %s83 = sphi 0, %s82
      %s99 = sphi 0, %s83
    $region4: #{tpu_custom_call.1} parent=1 // loop_header_branch
      %20 = sbr.rel (%p18) target = $region8
    $region5: #{tpu_custom_call.1} parent=1 // loop_body
      %s22 = ssub.s32 %s17, 1
      %s23 = ssub.s32 %s17, 2
      %s24 = sadd.s32 %s17, 1
      %s25 = ssub.s32 %s17, %s24
      %p26 = scmp.eq.s32.totalorder %s25, 0
      %s28 = sadd.s32 %s27, 1
      %s29 = scalar_select %p26, %s27, %s28
      %p32 = pneg %p26
      %p33 = scmp.eq.s32.totalorder %s17, 1
      %p34 = por %p32, %p33
      %p35 = scmp.ne.s32.totalorder %s27, %s30
      %p36 = scmp.eq.s32.totalorder %s17, 0
      %p37 = por %p35, %p36
      %p38 = scmp.ne.s32.totalorder %s27, %s30
      %p39 = scmp.eq.s32.totalorder %s22, 1
      %p40 = por %p38, %p39
      %p41 = scmp.ne.s32.totalorder %s30, %s31
      %p42 = scmp.eq.s32.totalorder %s22, 0
      %p43 = por %p41, %p42
      %p44 = scmp.ne.s32.totalorder %s30, %s31
      %p45 = scmp.eq.s32.totalorder %s23, 1
      %p46 = por %p44, %p45
      %p48 = scmp.ne.s32.totalorder %s31, %s47
      %p49 = scmp.eq.s32.totalorder %s23, 0
      %p50 = por %p48, %p49
      %s51 = ssub.s32 %s17, %s24
      %p52 = scmp.eq.s32.totalorder %s51, 0
      %s54 = sadd.s32 %s53, 1
      %s55 = scalar_select %p52, %s53, %s54
      %p58 = pneg %p52
      %p59 = scmp.eq.s32.totalorder %s17, 1
      %p60 = por %p58, %p59
      %p61 = scmp.ne.s32.totalorder %s53, %s56
      %p62 = scmp.eq.s32.totalorder %s17, 0
      %p63 = por %p61, %p62
      %p64 = scmp.ne.s32.totalorder %s53, %s56
      %p65 = scmp.eq.s32.totalorder %s22, 1
      %p66 = por %p64, %p65
      %p67 = scmp.ne.s32.totalorder %s56, %s57
      %p68 = scmp.eq.s32.totalorder %s22, 0
      %p69 = por %p67, %p68
      %p70 = scmp.ne.s32.totalorder %s56, %s57
      %p71 = scmp.eq.s32.totalorder %s23, 1
      %p72 = por %p70, %p71
      %p74 = scmp.ne.s32.totalorder %s57, %s73
      %p75 = scmp.eq.s32.totalorder %s23, 0
      %p76 = por %p74, %p75
      %s77 = ssub.s32 %s17, %s24
      %p78 = scmp.eq.s32.totalorder %s77, 0
      %s80 = sadd.s32 %s79, 1
      %s81 = scalar_select %p78, %s79, %s80
      %p84 = pneg %p78
      %p85 = scmp.eq.s32.totalorder %s17, 1
      %p86 = por %p84, %p85
      %p87 = scmp.ne.s32.totalorder %s79, %s82
      %p88 = scmp.eq.s32.totalorder %s17, 0
      %p89 = por %p87, %p88
      %p90 = scmp.ne.s32.totalorder %s79, %s82
      %p91 = scmp.eq.s32.totalorder %s22, 1
      %p92 = por %p90, %p91
      %p93 = scmp.ne.s32.totalorder %s82, %s83
      %p94 = scmp.eq.s32.totalorder %s22, 0
      %p95 = por %p93, %p94
      %p96 = scmp.ne.s32.totalorder %s82, %s83
      %p97 = scmp.eq.s32.totalorder %s23, 1
      %p98 = por %p96, %p97
      %p100 = scmp.ne.s32.totalorder %s83, %s99
      %p101 = scmp.eq.s32.totalorder %s23, 0
      %p102 = por %p100, %p101
      %p103 = scmp.le.s32.totalorder 1, %s17
      %p104 = scmp.lt.s32.totalorder %s17, 3
      %p105 = pnand %p103, %p104
      %p106 = pneg %p105
      // Predicated region
      $region9: #{tpu_custom_call.1} parent=5 // pred_check
        _
      $region10: #{tpu_custom_call.1} parent=5 // pred_check_branch
        %108 = sbr.rel (%p105) target = $region12
      $region11: #{tpu_custom_call.1} parent=5 // pred_region
        %s109 = ssub.s32 %s17, 1
      $region12: #{tpu_custom_call.1} parent=5 // pred_fallthru
        _
      %p110 = scmp.lt.s32.totalorder %s17, 2
      // Predicated region
      $region13: #{tpu_custom_call.1} parent=5 // pred_check
        %p111 = pneg %p110
      $region14: #{tpu_custom_call.1} parent=5 // pred_check_branch
        %113 = sbr.rel (%p111) target = $region16
      $region15: #{tpu_custom_call.1} parent=5 // pred_region
        // Predicated region
        $region17: #{tpu_custom_call.1} parent=15 // pred_check
          %p114 = pneg %p37
        $region18: #{tpu_custom_call.1} parent=15 // pred_check_branch
          %116 = sbr.rel (%p114) target = $region20
        $region19: #{tpu_custom_call.1} parent=15 // pred_region
          %s117 = sand.u32 %s27, 1
          %s118 = scalar_lea.sflag [#allocation4], %s117
          %s119 = sand.u32 %s27, 1
          %s120 = smul.addr %s119, 8
          %s121 = scalar_lea.vmem [#allocation3], %s120
          %s123 = ssub.s32 128, 128
          %124 = vsyncadd %s118, %s123
          %s125 = smul.addr %s17, 128
          %s126 = scalar_lea.hbm %s0, %s125
          %s128 = sshll.u32 %s121, 4
          %s129 = int_to_ptr.vmem [resolvable:$true] %s128
          %131 = dma.hbm_to_vmem [thread:$0]  %s126, 128, %s129, %s118
        $region20: #{tpu_custom_call.1} parent=15 // pred_fallthru
          _
        // Predicated region
        $region21: #{tpu_custom_call.1} parent=15 // pred_check
          %p132 = pneg %p63
        $region22: #{tpu_custom_call.1} parent=15 // pred_check_branch
          %134 = sbr.rel (%p132) target = $region24
        $region23: #{tpu_custom_call.1} parent=15 // pred_region
          %s135 = sand.u32 %s53, 1
          %s136 = scalar_lea.sflag [#allocation7], %s135
          %s137 = sand.u32 %s53, 1
          %s138 = smul.addr %s137, 8
          %s139 = scalar_lea.vmem [#allocation6], %s138
          %s141 = ssub.s32 128, 128
          %142 = vsyncadd %s136, %s141
          %s143 = smul.addr %s17, 128
          %s144 = scalar_lea.hbm %s1, %s143
          %s146 = sshll.u32 %s139, 4
          %s147 = int_to_ptr.vmem [resolvable:$true] %s146
          %149 = dma.hbm_to_vmem [thread:$0]  %s144, 128, %s147, %s136
        $region24: #{tpu_custom_call.1} parent=15 // pred_fallthru
          _
      $region16: #{tpu_custom_call.1} parent=5 // pred_fallthru
        _
      %p150 = scmp.le.s32.totalorder 1, %s17
      %p151 = scmp.lt.s32.totalorder %s17, 3
      %p152 = pnand %p150, %p151
      %p153 = pneg %p152
      // Predicated region
      $region25: #{tpu_custom_call.1} parent=5 // pred_check
        _
      $region26: #{tpu_custom_call.1} parent=5 // pred_check_branch
        %155 = sbr.rel (%p152) target = $region28
      $region27: #{tpu_custom_call.1} parent=5 // pred_region
        %s156 = ssub.s32 %s17, 1
        %s157 = sand.u32 %s30, 1
        %s158 = scalar_lea.sflag [#allocation4], %s157
        %s159 = sand.u32 %s30, 1
        %s160 = smul.addr %s159, 8
        %s161 = scalar_lea.vmem [#allocation3], %s160
        // Predicated region
        $region29: #{tpu_custom_call.1} parent=27 // pred_check
          %p162 = pneg %p43
        $region30: #{tpu_custom_call.1} parent=27 // pred_check_branch
          %164 = sbr.rel (%p162) target = $region32
        $region31: #{tpu_custom_call.1} parent=27 // pred_region
          %165 = dma.done %s158, 128
        $region32: #{tpu_custom_call.1} parent=27 // pred_fallthru
          _
        %s166 = sand.u32 %s56, 1
        %s167 = scalar_lea.sflag [#allocation7], %s166
        %s168 = sand.u32 %s56, 1
        %s169 = smul.addr %s168, 8
        %s170 = scalar_lea.vmem [#allocation6], %s169
        // Predicated region
        $region33: #{tpu_custom_call.1} parent=27 // pred_check
          %p171 = pneg %p69
        $region34: #{tpu_custom_call.1} parent=27 // pred_check_branch
          %173 = sbr.rel (%p171) target = $region36
        $region35: #{tpu_custom_call.1} parent=27 // pred_region
          %174 = dma.done %s167, 128
        $region36: #{tpu_custom_call.1} parent=27 // pred_fallthru
          _
        %s175 = sand.u32 %s30, 1
        %s176 = scalar_lea.sflag [#allocation4], %s175
        %s177 = sand.u32 %s30, 1
        %s178 = smul.addr %s177, 8
        %s179 = scalar_lea.vmem [#allocation3], %s178
        %p180 = pneg %p43
        %p181 = pneg %p40
        %s182 = sand.u32 %s56, 1
        %s183 = scalar_lea.sflag [#allocation7], %s182
        %s184 = sand.u32 %s56, 1
        %s185 = smul.addr %s184, 8
        %s186 = scalar_lea.vmem [#allocation6], %s185
        %p187 = pneg %p69
        %p188 = pneg %p66
        %p189 = pneg %p95
        %p190 = pneg %p92
        %s191 = sand.u32 %s82, 1
        %s192 = scalar_lea.sflag [#allocation5], %s191
        %s193 = sand.u32 %s82, 1
        %s194 = smul.addr %s193, 8
        %s195 = scalar_lea.vmem [#allocation8], %s194
        %v196 = vld [vmem:[%s161] sm:$0xff]
        %v197 = vlaneseq
        %v198 = vshrl.u32 %v197, 7
        %v199 = vand.u32 %v196, 4294967288
        %v200 = vor.u32 %v199, %v198
        %201 = vst [vmem:[#allocation2] sm:$0xff] %v200
        %v202 = vld [vmem:[#allocation2] sm:$0x1]
        %v203 = vlaneseq
        %v204 = vshrl.u32 %v203, 7
        %v205 = vsub.s32 0, %v204
        %v206 = vrot.slane %v202, %v205
        %vm207 = vcmp.lt.s32.totalorder %v206, %v200
        %v208 = vsel %vm207, 1, 0
        %v209 = vld [vmem:[#allocation2 + $0x1] sm:$0x1]
        %v210 = vlaneseq
        %v211 = vshrl.u32 %v210, 7
        %v212 = vsub.s32 0, %v211
        %v213 = vrot.slane %v209, %v212
        %vm214 = vcmp.lt.s32.totalorder %v213, %v200
        %v215 = vsel %vm214, 1, 0
        %v216 = vadd.s32 %v208, %v215
        %v217 = vld [vmem:[#allocation2 + $0x2] sm:$0x1]
        %v218 = vlaneseq
        %v219 = vshrl.u32 %v218, 7
        %v220 = vsub.s32 0, %v219
        %v221 = vrot.slane %v217, %v220
        %vm222 = vcmp.lt.s32.totalorder %v221, %v200
        %v223 = vsel %vm222, 1, 0
        %v224 = vadd.s32 %v216, %v223
        %v225 = vld [vmem:[#allocation2 + $0x3] sm:$0x1]
        %v226 = vlaneseq
        %v227 = vshrl.u32 %v226, 7
        %v228 = vsub.s32 0, %v227
        %v229 = vrot.slane %v225, %v228
        %vm230 = vcmp.lt.s32.totalorder %v229, %v200
        %v231 = vsel %vm230, 1, 0
        %v232 = vadd.s32 %v224, %v231
        %v233 = vld [vmem:[#allocation2 + $0x4] sm:$0x1]
        %v234 = vlaneseq
        %v235 = vshrl.u32 %v234, 7
        %v236 = vsub.s32 0, %v235
        %v237 = vrot.slane %v233, %v236
        %vm238 = vcmp.lt.s32.totalorder %v237, %v200
        %v239 = vsel %vm238, 1, 0
        %v240 = vadd.s32 %v232, %v239
        %v241 = vld [vmem:[#allocation2 + $0x5] sm:$0x1]
        %v242 = vlaneseq
        %v243 = vshrl.u32 %v242, 7
        %v244 = vsub.s32 0, %v243
        %v245 = vrot.slane %v241, %v244
        %vm246 = vcmp.lt.s32.totalorder %v245, %v200
        %v247 = vsel %vm246, 1, 0
        %v248 = vadd.s32 %v240, %v247
        %v249 = vld [vmem:[#allocation2 + $0x6] sm:$0x1]
        %v250 = vlaneseq
        %v251 = vshrl.u32 %v250, 7
        %v252 = vsub.s32 0, %v251
        %v253 = vrot.slane %v249, %v252
        %vm254 = vcmp.lt.s32.totalorder %v253, %v200
        %v255 = vsel %vm254, 1, 0
        %v256 = vadd.s32 %v248, %v255
        %v257 = vld [vmem:[#allocation2 + $0x7] sm:$0x1]
        %v258 = vlaneseq
        %v259 = vshrl.u32 %v258, 7
        %v260 = vsub.s32 0, %v259
        %v261 = vrot.slane %v257, %v260
        %vm262 = vcmp.lt.s32.totalorder %v261, %v200
        %v263 = vsel %vm262, 1, 0
        %v264 = vadd.s32 %v256, %v263
        %265 = vst [vmem:[#allocation2] sm:$0xff] %v264
        %v266 = vld [vmem:[#allocation2] sm:$0x1]
        %v267 = vld [vmem:[%s170] sm:$0x1]
        %v268 = vlaneseq
        %v269 = vshrl.u32 %v268, 7
        %v270 = vsub.s32 0, %v269
        %v271 = vrot.slane %v266, %v270
        %vm272 = vcmp.eq.s32.totalorder %v198, %v271
        %v273 = vlaneseq
        %v274 = vshrl.u32 %v273, 7
        %v275 = vsub.s32 0, %v274
        %v276 = vrot.slane %v267, %v275
        %v277 = vsel %vm272, %v276, 0.0
        %v278 = vld [vmem:[#allocation2 + $0x1] sm:$0x1]
        %v279 = vld [vmem:[%s170 + $0x1] sm:$0x1]
        %v280 = vlaneseq
        %v281 = vshrl.u32 %v280, 7
        %v282 = vsub.s32 0, %v281
        %v283 = vrot.slane %v278, %v282
        %vm284 = vcmp.eq.s32.totalorder %v198, %v283
        %v285 = vlaneseq
        %v286 = vshrl.u32 %v285, 7
        %v287 = vsub.s32 0, %v286
        %v288 = vrot.slane %v279, %v287
        %v289 = vsel %vm284, %v288, %v277
        %v290 = vld [vmem:[#allocation2 + $0x2] sm:$0x1]
        %v291 = vld [vmem:[%s170 + $0x2] sm:$0x1]
        %v292 = vlaneseq
        %v293 = vshrl.u32 %v292, 7
        %v294 = vsub.s32 0, %v293
        %v295 = vrot.slane %v290, %v294
        %vm296 = vcmp.eq.s32.totalorder %v198, %v295
        %v297 = vlaneseq
        %v298 = vshrl.u32 %v297, 7
        %v299 = vsub.s32 0, %v298
        %v300 = vrot.slane %v291, %v299
        %v301 = vsel %vm296, %v300, %v289
        %v302 = vld [vmem:[#allocation2 + $0x3] sm:$0x1]
        %v303 = vld [vmem:[%s170 + $0x3] sm:$0x1]
        %v304 = vlaneseq
        %v305 = vshrl.u32 %v304, 7
        %v306 = vsub.s32 0, %v305
        %v307 = vrot.slane %v302, %v306
        %vm308 = vcmp.eq.s32.totalorder %v198, %v307
        %v309 = vlaneseq
        %v310 = vshrl.u32 %v309, 7
        %v311 = vsub.s32 0, %v310
        %v312 = vrot.slane %v303, %v311
        %v313 = vsel %vm308, %v312, %v301
        %v314 = vld [vmem:[#allocation2 + $0x4] sm:$0x1]
        %v315 = vld [vmem:[%s170 + $0x4] sm:$0x1]
        %v316 = vlaneseq
        %v317 = vshrl.u32 %v316, 7
        %v318 = vsub.s32 0, %v317
        %v319 = vrot.slane %v314, %v318
        %vm320 = vcmp.eq.s32.totalorder %v198, %v319
        %v321 = vlaneseq
        %v322 = vshrl.u32 %v321, 7
        %v323 = vsub.s32 0, %v322
        %v324 = vrot.slane %v315, %v323
        %v325 = vsel %vm320, %v324, %v313
        %v326 = vld [vmem:[#allocation2 + $0x5] sm:$0x1]
        %v327 = vld [vmem:[%s170 + $0x5] sm:$0x1]
        %v328 = vlaneseq
        %v329 = vshrl.u32 %v328, 7
        %v330 = vsub.s32 0, %v329
        %v331 = vrot.slane %v326, %v330
        %vm332 = vcmp.eq.s32.totalorder %v198, %v331
        %v333 = vlaneseq
        %v334 = vshrl.u32 %v333, 7
        %v335 = vsub.s32 0, %v334
        %v336 = vrot.slane %v327, %v335
        %v337 = vsel %vm332, %v336, %v325
        %v338 = vld [vmem:[#allocation2 + $0x6] sm:$0x1]
        %v339 = vld [vmem:[%s170 + $0x6] sm:$0x1]
        %v340 = vlaneseq
        %v341 = vshrl.u32 %v340, 7
        %v342 = vsub.s32 0, %v341
        %v343 = vrot.slane %v338, %v342
        %vm344 = vcmp.eq.s32.totalorder %v198, %v343
        %v345 = vlaneseq
        %v346 = vshrl.u32 %v345, 7
        %v347 = vsub.s32 0, %v346
        %v348 = vrot.slane %v339, %v347
        %v349 = vsel %vm344, %v348, %v337
        %v350 = vld [vmem:[#allocation2 + $0x7] sm:$0x1]
        %v351 = vld [vmem:[%s170 + $0x7] sm:$0x1]
        %v352 = vlaneseq
        %v353 = vshrl.u32 %v352, 7
        %v354 = vsub.s32 0, %v353
        %v355 = vrot.slane %v350, %v354
        %vm356 = vcmp.eq.s32.totalorder %v198, %v355
        %v357 = vlaneseq
        %v358 = vshrl.u32 %v357, 7
        %v359 = vsub.s32 0, %v358
        %v360 = vrot.slane %v351, %v359
        %v361 = vsel %vm356, %v360, %v349
        %362 = vst [vmem:[%s195] sm:$0xff] %v361
        %s363 = sand.u32 %s82, 1
        %s364 = scalar_lea.sflag [#allocation5], %s363
        %s365 = sand.u32 %s82, 1
        %s366 = smul.addr %s365, 8
        %s367 = scalar_lea.vmem [#allocation8], %s366
        // Predicated region
        $region37: #{tpu_custom_call.1} parent=27 // pred_check
          %p368 = pneg %p92
        $region38: #{tpu_custom_call.1} parent=27 // pred_check_branch
          %370 = sbr.rel (%p368) target = $region40
        $region39: #{tpu_custom_call.1} parent=27 // pred_region
          %s372 = ssub.s32 128, 128
          %373 = vsyncadd %s364, %s372
          %s374 = smul.addr %s22, 128
          %s375 = scalar_lea.hbm %s2, %s374
          %s377 = sshll.u32 %s367, 4
          %s378 = int_to_ptr.vmem [resolvable:$true] %s377
          %380 = dma.vmem_to_hbm [thread:$0]  %s378, 128, %s375, %s364
        $region40: #{tpu_custom_call.1} parent=27 // pred_fallthru
          _
      $region28: #{tpu_custom_call.1} parent=5 // pred_fallthru
        _
      %p381 = scmp.le.s32.totalorder 2, %s17
      // Predicated region
      $region41: #{tpu_custom_call.1} parent=5 // pred_check
        %p382 = pneg %p381
      $region42: #{tpu_custom_call.1} parent=5 // pred_check_branch
        %384 = sbr.rel (%p382) target = $region44
      $region43: #{tpu_custom_call.1} parent=5 // pred_region
        %s385 = ssub.s32 %s17, 2
        // Predicated region
        $region45: #{tpu_custom_call.1} parent=43 // pred_check
          %p386 = pneg %p98
        $region46: #{tpu_custom_call.1} parent=43 // pred_check_branch
          %388 = sbr.rel (%p386) target = $region48
        $region47: #{tpu_custom_call.1} parent=43 // pred_region
          %s389 = sand.u32 %s83, 1
          %s390 = scalar_lea.sflag [#allocation5], %s389
          %s391 = sand.u32 %s83, 1
          %s392 = smul.addr %s391, 8
          %s393 = scalar_lea.vmem [#allocation8], %s392
          %394 = dma.done %s390, 128
        $region48: #{tpu_custom_call.1} parent=43 // pred_fallthru
          _
      $region44: #{tpu_custom_call.1} parent=5 // pred_fallthru
        _
    $region6: #{tpu_custom_call.1} parent=1 // loop_footer
      %s21 = sadd.s32 1, %s17
    $region7: #{tpu_custom_call.1} parent=1 // loop_footer_branch
      %16 = sbr.rel target = $region3
    $region8: #{tpu_custom_call.1} parent=1 // loop_exit
      _
    %395 = vsyncpa [#allocation4], 1
    %s396 = scalar_lea.sflag [#allocation4], 1
    %397 = vsyncpa %s396, 1
    %398 = vsyncpa [#allocation7], 1
    %s399 = scalar_lea.sflag [#allocation7], 1
    %400 = vsyncpa %s399, 1
    %401 = vsyncpa [#allocation5], 1
    %s402 = scalar_lea.sflag [#allocation5], 1
    %403 = vsyncpa %s402, 1

</llo_original>
